<compile_context>
chip_gen: v6e
topology: v6e:2x2x1
jax: 0.10.0
libtpu: 0.0.40
codegen_flags: <defaults>
</compile_context>

<pallas_src>
import jax
import jax.numpy as jnp
from jax.experimental import pallas as pl
from jax.experimental.pallas import tpu as pltpu


def _identity_kernel(x_ref, o_ref):
    # Whole-tile load/store; single VMEM block, no grid.
    o_ref[...] = x_ref[...]


def _identity(x: jax.Array) -> jax.Array:
    """Minimal Pallas pass-through used only as a runnable smoke test.

    No grid, no index_map, output aliased onto the input buffer so the call
    carries no extra HBM traffic beyond the unavoidable VMEM round trip.
    """
    return pl.pallas_call(
        _identity_kernel,
        out_shape=jax.ShapeDtypeStruct(x.shape, x.dtype),
        in_specs=[pl.BlockSpec(memory_space=pltpu.VMEM)],
        out_specs=pl.BlockSpec(memory_space=pltpu.VMEM),
        input_output_aliases={0: 0},
    )(x)


class Encoder:
    """JAX/Pallas mirror of the (empty) PyTorch Encoder module."""

    def __init__(self):
        # Reference __init__ defines no parameters.
        pass

    def forward(self):
        # Reference forward() has an empty body -> returns None.
        return None

    __call__ = forward


if __name__ == "__main__":
    # Deterministic input for the smoke-test kernel (the Encoder itself takes
    # no inputs). Lane-dense (rows, cols) f32 tile: 256 x 512 = 512 KiB,
    # (8, 128)-aligned, comfortably within VMEM on v5e / v6e / v7x.
    key = jax.random.PRNGKey(0)
    x = jax.random.normal(key, (256, 512), dtype=jnp.float32)

    # Run the Pallas kernel once and block on it.
    y = _identity(x)
    jax.block_until_ready(y)
    assert y.shape == x.shape and y.dtype == x.dtype
    assert bool(jnp.array_equal(y, x))

    # Exercise the Encoder exactly as the PyTorch module would behave.
    enc = Encoder()
    out = enc.forward()
    assert out is None

    print("KERNEL_OK")
</pallas_src>

<mosaic_0001>
module attributes {stable_mosaic.version = 11 : i64} {
  func.func @_identity_kernel(%arg0: memref<256x512xf32, #tpu.memory_space<vmem>>, %arg1: memref<256x512xf32, #tpu.memory_space<vmem>>) attributes {dimension_semantics = [], scalar_prefetch = 0 : i64, scratch_operands = 0 : i64, tpu.core_type = #tpu.core_type<tc>} {
    %c0 = arith.constant 0 : index
    %c0_0 = arith.constant 0 : index
    %0 = vector.load %arg0[%c0, %c0_0] : memref<256x512xf32, #tpu.memory_space<vmem>>, vector<256x512xf32>
    %c0_1 = arith.constant 0 : index
    %c0_2 = arith.constant 0 : index
    %1 = vector.load %arg1[%c0_1, %c0_2] : memref<256x512xf32, #tpu.memory_space<vmem>>, vector<256x512xf32>
    tpu.vector_store %arg1[%c0_1, %c0_2], %0 {strides = array<i32>} : memref<256x512xf32, #tpu.memory_space<vmem>>, vector<256x512xf32>,
    return
  }
}

</mosaic_0001>

<llo_original>
// kernel: tpu_custom_call.1
$region0: #{tpu_custom_call.1}
  #allocation0 [shape = 'u32[]', space=smem, size = 0x4, offset = 0x4, fixed_abs, tag = 'smem constant byte address 0x4 - core index']
  #allocation1 [shape = 'u32[144,128]{1,0:T(1,128)}', space=vmem, size = 0x12000, scoped, tag = 'internal scratch']
  %s0 = inlined_call_operand.hbm [shape: f32[256,512], index: 0, kind: input, shape index: {}, may-alias: {0,1}]
  %s1 = inlined_call_operand.hbm [shape: f32[256,512], index: 1, kind: output, shape index: {}, may-alias: {0,1}]
  %s2 = sld [smem:[#allocation0]]
  $region18: #{tpu_custom_call.1} parent=0
    _
  %s4 = ssub.s32 1, %s2
  %s5 = scalar_select 0, %s4, %s2
  $region1: #{tpu_custom_call.1} parent=0
    #allocation2 [shape = 'u8[524288]{0}', space=vmem, size = 0x80000, scoped, tag = 'input window, operand 0, single buffered']
    #allocation3 [shape = 's32[1]{0}', space=sflag, size = 0x4, scoped, tag = 'scoped memory for tpu_custom_call.1']
    #allocation4 [shape = 's32[1]{0}', space=sflag, size = 0x4, scoped, tag = 'scoped memory for tpu_custom_call.1']
    #allocation5 [shape = 'u8[524288]{0}', space=vmem, size = 0x80000, scoped, tag = 'output window, operand 0, single buffered']
    %6 = vsyncpa [#allocation3], 0
    %7 = vsyncpa [#allocation4], 0
    // Predicated region
    $region2: #{tpu_custom_call.1} parent=1 // pred_check
      _
    $region3: #{tpu_custom_call.1} parent=1 // pred_check_branch
      %9 = sbr.rel (0) target = $region5
    $region4: #{tpu_custom_call.1} parent=1 // pred_region
      %s11 = ssub.s32 16384, 16384
      %12 = vsyncadd [#allocation3], %s11
      %s13 = sshll.u32 [#allocation2], 4
      %s14 = int_to_ptr.vmem [resolvable:$true] %s13
      %19 = dma.hbm_to_vmem [thread:$0]  %s0, 16384, %s14, [#allocation3], 512, 512, 32
    $region5: #{tpu_custom_call.1} parent=1 // pred_fallthru
      _
    // Predicated region
    $region6: #{tpu_custom_call.1} parent=1 // pred_check
      _
    $region7: #{tpu_custom_call.1} parent=1 // pred_check_branch
      %21 = sbr.rel (0) target = $region9
    $region8: #{tpu_custom_call.1} parent=1 // pred_region
      %22 = dma.done [#allocation3], 16384
    $region9: #{tpu_custom_call.1} parent=1 // pred_fallthru
      _
    %v23 = vld [vmem:[#allocation2] sm:$0xff]
    %v24 = vld [vmem:[#allocation2 + $0x8] sm:$0xff]
    %v25 = vld [vmem:[#allocation2 + $0x10] sm:$0xff]
    %v26 = vld [vmem:[#allocation2 + $0x18] sm:$0xff]
    %v27 = vld [vmem:[#allocation2 + $0x20] sm:$0xff]
    %v28 = vld [vmem:[#allocation2 + $0x28] sm:$0xff]
    %v29 = vld [vmem:[#allocation2 + $0x30] sm:$0xff]
    %v30 = vld [vmem:[#allocation2 + $0x38] sm:$0xff]
    %v31 = vld [vmem:[#allocation2 + $0x40] sm:$0xff]
    %v32 = vld [vmem:[#allocation2 + $0x48] sm:$0xff]
    %v33 = vld [vmem:[#allocation2 + $0x50] sm:$0xff]
    %v34 = vld [vmem:[#allocation2 + $0x58] sm:$0xff]
    %v35 = vld [vmem:[#allocation2 + $0x60] sm:$0xff]
    %v36 = vld [vmem:[#allocation2 + $0x68] sm:$0xff]
    %v37 = vld [vmem:[#allocation2 + $0x70] sm:$0xff]
    %v38 = vld [vmem:[#allocation2 + $0x78] sm:$0xff]
    %v39 = vld [vmem:[#allocation2 + $0x80] sm:$0xff]
    %v40 = vld [vmem:[#allocation2 + $0x88] sm:$0xff]
    %v41 = vld [vmem:[#allocation2 + $0x90] sm:$0xff]
    %v42 = vld [vmem:[#allocation2 + $0x98] sm:$0xff]
    %v43 = vld [vmem:[#allocation2 + $0xa0] sm:$0xff]
    %v44 = vld [vmem:[#allocation2 + $0xa8] sm:$0xff]
    %v45 = vld [vmem:[#allocation2 + $0xb0] sm:$0xff]
    %v46 = vld [vmem:[#allocation2 + $0xb8] sm:$0xff]
    %v47 = vld [vmem:[#allocation2 + $0xc0] sm:$0xff]
    %v48 = vld [vmem:[#allocation2 + $0xc8] sm:$0xff]
    %v49 = vld [vmem:[#allocation2 + $0xd0] sm:$0xff]
    %v50 = vld [vmem:[#allocation2 + $0xd8] sm:$0xff]
    %v51 = vld [vmem:[#allocation2 + $0xe0] sm:$0xff]
    %v52 = vld [vmem:[#allocation2 + $0xe8] sm:$0xff]
    %v53 = vld [vmem:[#allocation2 + $0xf0] sm:$0xff]
    %v54 = vld [vmem:[#allocation2 + $0xf8] sm:$0xff]
    %v55 = vld [vmem:[#allocation2 + $0x100] sm:$0xff]
    %v56 = vld [vmem:[#allocation2 + $0x108] sm:$0xff]
    %v57 = vld [vmem:[#allocation2 + $0x110] sm:$0xff]
    %v58 = vld [vmem:[#allocation2 + $0x118] sm:$0xff]
    %v59 = vld [vmem:[#allocation2 + $0x120] sm:$0xff]
    %v60 = vld [vmem:[#allocation2 + $0x128] sm:$0xff]
    %v61 = vld [vmem:[#allocation2 + $0x130] sm:$0xff]
    %v62 = vld [vmem:[#allocation2 + $0x138] sm:$0xff]
    %v63 = vld [vmem:[#allocation2 + $0x140] sm:$0xff]
    %v64 = vld [vmem:[#allocation2 + $0x148] sm:$0xff]
    %v65 = vld [vmem:[#allocation2 + $0x150] sm:$0xff]
    %v66 = vld [vmem:[#allocation2 + $0x158] sm:$0xff]
    %v67 = vld [vmem:[#allocation2 + $0x160] sm:$0xff]
    %v68 = vld [vmem:[#allocation2 + $0x168] sm:$0xff]
    %v69 = vld [vmem:[#allocation2 + $0x170] sm:$0xff]
    %v70 = vld [vmem:[#allocation2 + $0x178] sm:$0xff]
    %v71 = vld [vmem:[#allocation2 + $0x180] sm:$0xff]
    %v72 = vld [vmem:[#allocation2 + $0x188] sm:$0xff]
    %v73 = vld [vmem:[#allocation2 + $0x190] sm:$0xff]
    %v74 = vld [vmem:[#allocation2 + $0x198] sm:$0xff]
    %v75 = vld [vmem:[#allocation2 + $0x1a0] sm:$0xff]
    %v76 = vld [vmem:[#allocation2 + $0x1a8] sm:$0xff]
    %v77 = vld [vmem:[#allocation2 + $0x1b0] sm:$0xff]
    %v78 = vld [vmem:[#allocation2 + $0x1b8] sm:$0xff]
    %v79 = vld [vmem:[#allocation2 + $0x1c0] sm:$0xff]
    %v80 = vld [vmem:[#allocation2 + $0x1c8] sm:$0xff]
    %v81 = vld [vmem:[#allocation2 + $0x1d0] sm:$0xff]
    %v82 = vld [vmem:[#allocation2 + $0x1d8] sm:$0xff]
    %v83 = vld [vmem:[#allocation2 + $0x1e0] sm:$0xff]
    %v84 = vld [vmem:[#allocation2 + $0x1e8] sm:$0xff]
    %v85 = vld [vmem:[#allocation2 + $0x1f0] sm:$0xff]
    %v86 = vld [vmem:[#allocation2 + $0x1f8] sm:$0xff]
    %v87 = vld [vmem:[#allocation2 + $0x200] sm:$0xff]
    %v88 = vld [vmem:[#allocation2 + $0x208] sm:$0xff]
    %v89 = vld [vmem:[#allocation2 + $0x210] sm:$0xff]
    %v90 = vld [vmem:[#allocation2 + $0x218] sm:$0xff]
    %v91 = vld [vmem:[#allocation2 + $0x220] sm:$0xff]
    %v92 = vld [vmem:[#allocation2 + $0x228] sm:$0xff]
    %v93 = vld [vmem:[#allocation2 + $0x230] sm:$0xff]
    %v94 = vld [vmem:[#allocation2 + $0x238] sm:$0xff]
    %v95 = vld [vmem:[#allocation2 + $0x240] sm:$0xff]
    %v96 = vld [vmem:[#allocation2 + $0x248] sm:$0xff]
    %v97 = vld [vmem:[#allocation2 + $0x250] sm:$0xff]
    %v98 = vld [vmem:[#allocation2 + $0x258] sm:$0xff]
    %v99 = vld [vmem:[#allocation2 + $0x260] sm:$0xff]
    %v100 = vld [vmem:[#allocation2 + $0x268] sm:$0xff]
    %v101 = vld [vmem:[#allocation2 + $0x270] sm:$0xff]
    %v102 = vld [vmem:[#allocation2 + $0x278] sm:$0xff]
    %v103 = vld [vmem:[#allocation2 + $0x280] sm:$0xff]
    %v104 = vld [vmem:[#allocation2 + $0x288] sm:$0xff]
    %v105 = vld [vmem:[#allocation2 + $0x290] sm:$0xff]
    %v106 = vld [vmem:[#allocation2 + $0x298] sm:$0xff]
    %v107 = vld [vmem:[#allocation2 + $0x2a0] sm:$0xff]
    %v108 = vld [vmem:[#allocation2 + $0x2a8] sm:$0xff]
    %v109 = vld [vmem:[#allocation2 + $0x2b0] sm:$0xff]
    %v110 = vld [vmem:[#allocation2 + $0x2b8] sm:$0xff]
    %v111 = vld [vmem:[#allocation2 + $0x2c0] sm:$0xff]
    %v112 = vld [vmem:[#allocation2 + $0x2c8] sm:$0xff]
    %v113 = vld [vmem:[#allocation2 + $0x2d0] sm:$0xff]
    %v114 = vld [vmem:[#allocation2 + $0x2d8] sm:$0xff]
    %v115 = vld [vmem:[#allocation2 + $0x2e0] sm:$0xff]
    %v116 = vld [vmem:[#allocation2 + $0x2e8] sm:$0xff]
    %v117 = vld [vmem:[#allocation2 + $0x2f0] sm:$0xff]
    %v118 = vld [vmem:[#allocation2 + $0x2f8] sm:$0xff]
    %v119 = vld [vmem:[#allocation2 + $0x300] sm:$0xff]
    %v120 = vld [vmem:[#allocation2 + $0x308] sm:$0xff]
    %v121 = vld [vmem:[#allocation2 + $0x310] sm:$0xff]
    %v122 = vld [vmem:[#allocation2 + $0x318] sm:$0xff]
    %v123 = vld [vmem:[#allocation2 + $0x320] sm:$0xff]
    %v124 = vld [vmem:[#allocation2 + $0x328] sm:$0xff]
    %v125 = vld [vmem:[#allocation2 + $0x330] sm:$0xff]
    %v126 = vld [vmem:[#allocation2 + $0x338] sm:$0xff]
    %v127 = vld [vmem:[#allocation2 + $0x340] sm:$0xff]
    %v128 = vld [vmem:[#allocation2 + $0x348] sm:$0xff]
    %v129 = vld [vmem:[#allocation2 + $0x350] sm:$0xff]
    %v130 = vld [vmem:[#allocation2 + $0x358] sm:$0xff]
    %v131 = vld [vmem:[#allocation2 + $0x360] sm:$0xff]
    %v132 = vld [vmem:[#allocation2 + $0x368] sm:$0xff]
    %v133 = vld [vmem:[#allocation2 + $0x370] sm:$0xff]
    %v134 = vld [vmem:[#allocation2 + $0x378] sm:$0xff]
    %v135 = vld [vmem:[#allocation2 + $0x380] sm:$0xff]
    %v136 = vld [vmem:[#allocation2 + $0x388] sm:$0xff]
    %v137 = vld [vmem:[#allocation2 + $0x390] sm:$0xff]
    %v138 = vld [vmem:[#allocation2 + $0x398] sm:$0xff]
    %v139 = vld [vmem:[#allocation2 + $0x3a0] sm:$0xff]
    %v140 = vld [vmem:[#allocation2 + $0x3a8] sm:$0xff]
    %v141 = vld [vmem:[#allocation2 + $0x3b0] sm:$0xff]
    %v142 = vld [vmem:[#allocation2 + $0x3b8] sm:$0xff]
    %v143 = vld [vmem:[#allocation2 + $0x3c0] sm:$0xff]
    %v144 = vld [vmem:[#allocation2 + $0x3c8] sm:$0xff]
    %v145 = vld [vmem:[#allocation2 + $0x3d0] sm:$0xff]
    %v146 = vld [vmem:[#allocation2 + $0x3d8] sm:$0xff]
    %v147 = vld [vmem:[#allocation2 + $0x3e0] sm:$0xff]
    %v148 = vld [vmem:[#allocation2 + $0x3e8] sm:$0xff]
    %v149 = vld [vmem:[#allocation2 + $0x3f0] sm:$0xff]
    %v150 = vld [vmem:[#allocation2 + $0x3f8] sm:$0xff]
    %151 = vst [vmem:[#allocation5] sm:$0xff] %v23
    %152 = vst [vmem:[#allocation5 + $0x8] sm:$0xff] %v24
    %153 = vst [vmem:[#allocation5 + $0x10] sm:$0xff] %v25
    %154 = vst [vmem:[#allocation5 + $0x18] sm:$0xff] %v26
    %155 = vst [vmem:[#allocation5 + $0x20] sm:$0xff] %v27
    %156 = vst [vmem:[#allocation5 + $0x28] sm:$0xff] %v28
    %157 = vst [vmem:[#allocation5 + $0x30] sm:$0xff] %v29
    %158 = vst [vmem:[#allocation5 + $0x38] sm:$0xff] %v30
    %159 = vst [vmem:[#allocation5 + $0x40] sm:$0xff] %v31
    %160 = vst [vmem:[#allocation5 + $0x48] sm:$0xff] %v32
    %161 = vst [vmem:[#allocation5 + $0x50] sm:$0xff] %v33
    %162 = vst [vmem:[#allocation5 + $0x58] sm:$0xff] %v34
    %163 = vst [vmem:[#allocation5 + $0x60] sm:$0xff] %v35
    %164 = vst [vmem:[#allocation5 + $0x68] sm:$0xff] %v36
    %165 = vst [vmem:[#allocation5 + $0x70] sm:$0xff] %v37
    %166 = vst [vmem:[#allocation5 + $0x78] sm:$0xff] %v38
    %167 = vst [vmem:[#allocation5 + $0x80] sm:$0xff] %v39
    %168 = vst [vmem:[#allocation5 + $0x88] sm:$0xff] %v40
    %169 = vst [vmem:[#allocation5 + $0x90] sm:$0xff] %v41
    %170 = vst [vmem:[#allocation5 + $0x98] sm:$0xff] %v42
    %171 = vst [vmem:[#allocation5 + $0xa0] sm:$0xff] %v43
    %172 = vst [vmem:[#allocation5 + $0xa8] sm:$0xff] %v44
    %173 = vst [vmem:[#allocation5 + $0xb0] sm:$0xff] %v45
    %174 = vst [vmem:[#allocation5 + $0xb8] sm:$0xff] %v46
    %175 = vst [vmem:[#allocation5 + $0xc0] sm:$0xff] %v47
    %176 = vst [vmem:[#allocation5 + $0xc8] sm:$0xff] %v48
    %177 = vst [vmem:[#allocation5 + $0xd0] sm:$0xff] %v49
    %178 = vst [vmem:[#allocation5 + $0xd8] sm:$0xff] %v50
    %179 = vst [vmem:[#allocation5 + $0xe0] sm:$0xff] %v51
    %180 = vst [vmem:[#allocation5 + $0xe8] sm:$0xff] %v52
    %181 = vst [vmem:[#allocation5 + $0xf0] sm:$0xff] %v53
    %182 = vst [vmem:[#allocation5 + $0xf8] sm:$0xff] %v54
    %183 = vst [vmem:[#allocation5 + $0x100] sm:$0xff] %v55
    %184 = vst [vmem:[#allocation5 + $0x108] sm:$0xff] %v56
    %185 = vst [vmem:[#allocation5 + $0x110] sm:$0xff] %v57
    %186 = vst [vmem:[#allocation5 + $0x118] sm:$0xff] %v58
    %187 = vst [vmem:[#allocation5 + $0x120] sm:$0xff] %v59
    %188 = vst [vmem:[#allocation5 + $0x128] sm:$0xff] %v60
    %189 = vst [vmem:[#allocation5 + $0x130] sm:$0xff] %v61
    %190 = vst [vmem:[#allocation5 + $0x138] sm:$0xff] %v62
    %191 = vst [vmem:[#allocation5 + $0x140] sm:$0xff] %v63
    %192 = vst [vmem:[#allocation5 + $0x148] sm:$0xff] %v64
    %193 = vst [vmem:[#allocation5 + $0x150] sm:$0xff] %v65
    %194 = vst [vmem:[#allocation5 + $0x158] sm:$0xff] %v66
    %195 = vst [vmem:[#allocation5 + $0x160] sm:$0xff] %v67
    %196 = vst [vmem:[#allocation5 + $0x168] sm:$0xff] %v68
    %197 = vst [vmem:[#allocation5 + $0x170] sm:$0xff] %v69
    %198 = vst [vmem:[#allocation5 + $0x178] sm:$0xff] %v70
    %199 = vst [vmem:[#allocation5 + $0x180] sm:$0xff] %v71
    %200 = vst [vmem:[#allocation5 + $0x188] sm:$0xff] %v72
    %201 = vst [vmem:[#allocation5 + $0x190] sm:$0xff] %v73
    %202 = vst [vmem:[#allocation5 + $0x198] sm:$0xff] %v74
    %203 = vst [vmem:[#allocation5 + $0x1a0] sm:$0xff] %v75
    %204 = vst [vmem:[#allocation5 + $0x1a8] sm:$0xff] %v76
    %205 = vst [vmem:[#allocation5 + $0x1b0] sm:$0xff] %v77
    %206 = vst [vmem:[#allocation5 + $0x1b8] sm:$0xff] %v78
    %207 = vst [vmem:[#allocation5 + $0x1c0] sm:$0xff] %v79
    %208 = vst [vmem:[#allocation5 + $0x1c8] sm:$0xff] %v80
    %209 = vst [vmem:[#allocation5 + $0x1d0] sm:$0xff] %v81
    %210 = vst [vmem:[#allocation5 + $0x1d8] sm:$0xff] %v82
    %211 = vst [vmem:[#allocation5 + $0x1e0] sm:$0xff] %v83
    %212 = vst [vmem:[#allocation5 + $0x1e8] sm:$0xff] %v84
    %213 = vst [vmem:[#allocation5 + $0x1f0] sm:$0xff] %v85
    %214 = vst [vmem:[#allocation5 + $0x1f8] sm:$0xff] %v86
    %215 = vst [vmem:[#allocation5 + $0x200] sm:$0xff] %v87
    %216 = vst [vmem:[#allocation5 + $0x208] sm:$0xff] %v88
    %217 = vst [vmem:[#allocation5 + $0x210] sm:$0xff] %v89
    %218 = vst [vmem:[#allocation5 + $0x218] sm:$0xff] %v90
    %219 = vst [vmem:[#allocation5 + $0x220] sm:$0xff] %v91
    %220 = vst [vmem:[#allocation5 + $0x228] sm:$0xff] %v92
    %221 = vst [vmem:[#allocation5 + $0x230] sm:$0xff] %v93
    %222 = vst [vmem:[#allocation5 + $0x238] sm:$0xff] %v94
    %223 = vst [vmem:[#allocation5 + $0x240] sm:$0xff] %v95
    %224 = vst [vmem:[#allocation5 + $0x248] sm:$0xff] %v96
    %225 = vst [vmem:[#allocation5 + $0x250] sm:$0xff] %v97
    %226 = vst [vmem:[#allocation5 + $0x258] sm:$0xff] %v98
    %227 = vst [vmem:[#allocation5 + $0x260] sm:$0xff] %v99
    %228 = vst [vmem:[#allocation5 + $0x268] sm:$0xff] %v100
    %229 = vst [vmem:[#allocation5 + $0x270] sm:$0xff] %v101
    %230 = vst [vmem:[#allocation5 + $0x278] sm:$0xff] %v102
    %231 = vst [vmem:[#allocation5 + $0x280] sm:$0xff] %v103
    %232 = vst [vmem:[#allocation5 + $0x288] sm:$0xff] %v104
    %233 = vst [vmem:[#allocation5 + $0x290] sm:$0xff] %v105
    %234 = vst [vmem:[#allocation5 + $0x298] sm:$0xff] %v106
    %235 = vst [vmem:[#allocation5 + $0x2a0] sm:$0xff] %v107
    %236 = vst [vmem:[#allocation5 + $0x2a8] sm:$0xff] %v108
    %237 = vst [vmem:[#allocation5 + $0x2b0] sm:$0xff] %v109
    %238 = vst [vmem:[#allocation5 + $0x2b8] sm:$0xff] %v110
    %239 = vst [vmem:[#allocation5 + $0x2c0] sm:$0xff] %v111
    %240 = vst [vmem:[#allocation5 + $0x2c8] sm:$0xff] %v112
    %241 = vst [vmem:[#allocation5 + $0x2d0] sm:$0xff] %v113
    %242 = vst [vmem:[#allocation5 + $0x2d8] sm:$0xff] %v114
    %243 = vst [vmem:[#allocation5 + $0x2e0] sm:$0xff] %v115
    %244 = vst [vmem:[#allocation5 + $0x2e8] sm:$0xff] %v116
    %245 = vst [vmem:[#allocation5 + $0x2f0] sm:$0xff] %v117
    %246 = vst [vmem:[#allocation5 + $0x2f8] sm:$0xff] %v118
    %247 = vst [vmem:[#allocation5 + $0x300] sm:$0xff] %v119
    %248 = vst [vmem:[#allocation5 + $0x308] sm:$0xff] %v120
    %249 = vst [vmem:[#allocation5 + $0x310] sm:$0xff] %v121
    %250 = vst [vmem:[#allocation5 + $0x318] sm:$0xff] %v122
    %251 = vst [vmem:[#allocation5 + $0x320] sm:$0xff] %v123
    %252 = vst [vmem:[#allocation5 + $0x328] sm:$0xff] %v124
    %253 = vst [vmem:[#allocation5 + $0x330] sm:$0xff] %v125
    %254 = vst [vmem:[#allocation5 + $0x338] sm:$0xff] %v126
    %255 = vst [vmem:[#allocation5 + $0x340] sm:$0xff] %v127
    %256 = vst [vmem:[#allocation5 + $0x348] sm:$0xff] %v128
    %257 = vst [vmem:[#allocation5 + $0x350] sm:$0xff] %v129
    %258 = vst [vmem:[#allocation5 + $0x358] sm:$0xff] %v130
    %259 = vst [vmem:[#allocation5 + $0x360] sm:$0xff] %v131
    %260 = vst [vmem:[#allocation5 + $0x368] sm:$0xff] %v132
    %261 = vst [vmem:[#allocation5 + $0x370] sm:$0xff] %v133
    %262 = vst [vmem:[#allocation5 + $0x378] sm:$0xff] %v134
    %263 = vst [vmem:[#allocation5 + $0x380] sm:$0xff] %v135
    %264 = vst [vmem:[#allocation5 + $0x388] sm:$0xff] %v136
    %265 = vst [vmem:[#allocation5 + $0x390] sm:$0xff] %v137
    %266 = vst [vmem:[#allocation5 + $0x398] sm:$0xff] %v138
    %267 = vst [vmem:[#allocation5 + $0x3a0] sm:$0xff] %v139
    %268 = vst [vmem:[#allocation5 + $0x3a8] sm:$0xff] %v140
    %269 = vst [vmem:[#allocation5 + $0x3b0] sm:$0xff] %v141
    %270 = vst [vmem:[#allocation5 + $0x3b8] sm:$0xff] %v142
    %271 = vst [vmem:[#allocation5 + $0x3c0] sm:$0xff] %v143
    %272 = vst [vmem:[#allocation5 + $0x3c8] sm:$0xff] %v144
    %273 = vst [vmem:[#allocation5 + $0x3d0] sm:$0xff] %v145
    %274 = vst [vmem:[#allocation5 + $0x3d8] sm:$0xff] %v146
    %275 = vst [vmem:[#allocation5 + $0x3e0] sm:$0xff] %v147
    %276 = vst [vmem:[#allocation5 + $0x3e8] sm:$0xff] %v148
    %277 = vst [vmem:[#allocation5 + $0x3f0] sm:$0xff] %v149
    %278 = vst [vmem:[#allocation5 + $0x3f8] sm:$0xff] %v150
    // Predicated region
    $region10: #{tpu_custom_call.1} parent=1 // pred_check
      _
    $region11: #{tpu_custom_call.1} parent=1 // pred_check_branch
      %280 = sbr.rel (0) target = $region13
    $region12: #{tpu_custom_call.1} parent=1 // pred_region
      %s282 = ssub.s32 16384, 16384
      %283 = vsyncadd [#allocation4], %s282
      %s284 = sshll.u32 [#allocation5], 4
      %s285 = int_to_ptr.vmem [resolvable:$true] %s284
      %290 = dma.vmem_to_hbm [thread:$0]  %s285, 16384, %s1, [#allocation4], 512, 512, 32
    $region13: #{tpu_custom_call.1} parent=1 // pred_fallthru
      _
    // Predicated region
    $region14: #{tpu_custom_call.1} parent=1 // pred_check
      _
    $region15: #{tpu_custom_call.1} parent=1 // pred_check_branch
      %292 = sbr.rel (0) target = $region17
    $region16: #{tpu_custom_call.1} parent=1 // pred_region
      %293 = dma.done [#allocation4], 16384
    $region17: #{tpu_custom_call.1} parent=1 // pred_fallthru
      _
    %294 = vsyncpa [#allocation3], 1
    %295 = vsyncpa [#allocation4], 1

</llo_original>
